<compile_context>
chip_gen: v6e
topology: v6e:2x2x1
jax: 0.10.0
libtpu: 0.0.40
codegen_flags: <defaults>
</compile_context>

<pallas_src>
import jax
import jax.numpy as jnp
from jax import lax
from jax.experimental import pallas as pl
from jax.experimental.pallas import tpu as pltpu

_STRIP_ROWS = 8  # one sublane tile; x/acc/h for a strip stay in vregs


def simplenet_kernel(w1_ref, b1_ref, w2_ref, b2_ref, x_ref, o_ref):
    """One (row_tile, lane_tile) block: y = b2 + sum_f w2[f] * relu(w1[f]*x + b1[f])."""
    n_hidden = w1_ref.shape[0]
    row_tile, lane_tile = x_ref.shape
    n_strips = row_tile // _STRIP_ROWS

    # Hoist all SMEM scalar reads and the b2 broadcast out of the strip loop
    # (JAX does not CSE broadcast_in_dim; scalars read once per grid step).
    w1 = [w1_ref[f] for f in range(n_hidden)]
    b1 = [b1_ref[f] for f in range(n_hidden)]
    w2 = [w2_ref[f] for f in range(n_hidden)]
    acc0 = jnp.full((_STRIP_ROWS, lane_tile), b2_ref[0], dtype=jnp.float32)

    def strip_body(s, carry):
        r0 = pl.multiple_of(s * _STRIP_ROWS, _STRIP_ROWS)
        x = x_ref[pl.ds(r0, _STRIP_ROWS), :]
        acc = acc0
        # Unrolled over the 8 hidden features: pure VPU mul/add/max, no MXU/XLU.
        for f in range(n_hidden):
            h = jnp.maximum(x * w1[f] + b1[f], 0.0)
            acc = acc + h * w2[f]
        o_ref[pl.ds(r0, _STRIP_ROWS), :] = acc.astype(o_ref.dtype)
        return carry

    lax.fori_loop(0, n_strips, strip_body, 0, unroll=True)


def _jnp_forward(x, fc1_w, fc1_b, fc2_w, fc2_b):
    h = jnp.maximum(x @ fc1_w.T + fc1_b, 0.0)
    return h @ fc2_w.T + fc2_b


def simplenet_forward(x, fc1_w, fc1_b, fc2_w, fc2_b, *,
                      lane_tile=1024, block_rows=256, min_pallas_batch=1024):
    """Pallas forward for SimpleNet.

    x: (B, 1) f32; fc1_w: (8, 1); fc1_b: (8,); fc2_w: (1, 8); fc2_b: (1,)
    returns (B, 1) f32 matching relu(x @ fc1_w.T + fc1_b) @ fc2_w.T + fc2_b.
    """
    B = x.shape[0]
    x = x.astype(jnp.float32)
    fc1_w = fc1_w.astype(jnp.float32)
    fc1_b = fc1_b.astype(jnp.float32)
    fc2_w = fc2_w.astype(jnp.float32)
    fc2_b = fc2_b.astype(jnp.float32)

    # Small-batch fast path: a fused XLA elementwise expression beats the
    # kernel launch + tiling overhead for tiny B.
    if B < min_pallas_batch:
        return _jnp_forward(x, fc1_w, fc1_b, fc2_w, fc2_b).reshape(B, 1)

    # Lane-dense batch layout: (B,) -> (rows, lane_tile). Free reshape when B
    # is a multiple of lane_tile (no pad copy, no output slice copy).
    xf = x.reshape(-1)
    padded = pl.cdiv(B, lane_tile) * lane_tile
    if padded != B:
        # TODO(synk): ragged tail still costs one pad + one slice copy; could be
        # removed by masking the last block's store in-kernel instead.
        xf = jnp.pad(xf, (0, padded - B))
    rows = padded // lane_tile
    x2d = xf.reshape(rows, lane_tile)

    # Block rows: multiple of the 8-row strip, capped so one block <= ~1 MiB
    # (4 MiB double-buffered in+out -> fits every generation's scoped VMEM),
    # and small enough that the grid has >= 2 steps when possible so v7x's two
    # TensorCores both get work via the "parallel" axis.
    half_rows = -(-rows // 2)
    row_tile = min(block_rows,
                   max(_STRIP_ROWS, -(-half_rows // _STRIP_ROWS) * _STRIP_ROWS))
    grid = (pl.cdiv(rows, row_tile),)

    w1v = fc1_w.reshape(-1)   # (8,)
    b1v = fc1_b.reshape(-1)   # (8,)
    w2v = fc2_w.reshape(-1)   # (8,)
    b2v = fc2_b.reshape(-1)   # (1,)

    smem_spec = pl.BlockSpec(memory_space=pltpu.MemorySpace.SMEM)
    out2d = pl.pallas_call(
        simplenet_kernel,
        out_shape=jax.ShapeDtypeStruct((rows, lane_tile), jnp.float32),
        grid=grid,
        in_specs=[
            smem_spec,   # w1 (resident scalars)
            smem_spec,   # b1
            smem_spec,   # w2
            smem_spec,   # b2
            pl.BlockSpec((row_tile, lane_tile), lambda i: (i, 0)),
        ],
        out_specs=pl.BlockSpec((row_tile, lane_tile), lambda i: (i, 0)),
        compiler_params=pltpu.CompilerParams(
            dimension_semantics=("parallel",)),
    )(w1v, b1v, w2v, b2v, x2d)

    out = out2d.reshape(-1)
    if padded != B:
        out = out[:B]
    return out.reshape(B, 1)


if __name__ == "__main__":
    key = jax.random.PRNGKey(0)
    k_x, k_w1, k_b1, k_w2, k_b2 = jax.random.split(key, 5)

    # Deterministic parameters in PyTorch nn.Linear layouts.
    fc1_w = jax.random.normal(k_w1, (8, 1), dtype=jnp.float32) * 0.5  # fc1.weight
    fc1_b = jax.random.normal(k_b1, (8,), dtype=jnp.float32) * 0.1    # fc1.bias
    fc2_w = jax.random.normal(k_w2, (1, 8), dtype=jnp.float32) * 0.5  # fc2.weight
    fc2_b = jax.random.normal(k_b2, (1,), dtype=jnp.float32) * 0.1    # fc2.bias

    # 1) Pallas path, batch an exact multiple of lane_tile (zero-copy layout).
    B = 8192
    x = jax.random.normal(k_x, (B, 1), dtype=jnp.float32)
    out = jax.block_until_ready(simplenet_forward(x, fc1_w, fc1_b, fc2_w, fc2_b))
    ref = jnp.maximum(x @ fc1_w.T + fc1_b, 0.0) @ fc2_w.T + fc2_b
    assert out.shape == (B, 1)
    assert jnp.allclose(out, ref, atol=1e-5, rtol=1e-5)

    # 2) Pallas path, ragged batch (pad + partial edge block + 2 grid steps).
    B2 = 9000
    x2 = jax.random.normal(k_x, (B2, 1), dtype=jnp.float32)
    out2 = jax.block_until_ready(simplenet_forward(x2, fc1_w, fc1_b, fc2_w, fc2_b))
    ref2 = jnp.maximum(x2 @ fc1_w.T + fc1_b, 0.0) @ fc2_w.T + fc2_b
    assert jnp.allclose(out2, ref2, atol=1e-5, rtol=1e-5)

    # 3) Small-batch fast path (pure jnp, no pallas_call).
    B3 = 8
    x3 = jax.random.normal(k_x, (B3, 1), dtype=jnp.float32)
    out3 = jax.block_until_ready(simplenet_forward(x3, fc1_w, fc1_b, fc2_w, fc2_b))
    ref3 = jnp.maximum(x3 @ fc1_w.T + fc1_b, 0.0) @ fc2_w.T + fc2_b
    assert jnp.allclose(out3, ref3, atol=1e-5, rtol=1e-5)

    print("KERNEL_OK")
</pallas_src>

<mosaic_0001>
module attributes {stable_mosaic.version = 11 : i64} {
  func.func @simplenet_kernel(%arg0: i32, %arg1: memref<8xf32, #tpu.memory_space<smem>>, %arg2: memref<8xf32, #tpu.memory_space<smem>>, %arg3: memref<8xf32, #tpu.memory_space<smem>>, %arg4: memref<1xf32, #tpu.memory_space<smem>>, %arg5: memref<8x1024xf32, #tpu.memory_space<vmem>>, %arg6: memref<8x1024xf32, #tpu.memory_space<vmem>>) attributes {dimension_semantics = [#tpu.dimension_semantics<parallel>], iteration_bounds = array<i64: 1>, scalar_prefetch = 0 : i64, scratch_operands = 0 : i64, tpu.core_type = #tpu.core_type<tc>, window_params = [{transform_indices = @transform_0, window_bounds = array<i64: 8>}, {transform_indices = @transform_1, window_bounds = array<i64: 8>}, {transform_indices = @transform_2, window_bounds = array<i64: 8>}, {transform_indices = @transform_3, window_bounds = array<i64: 1>}, {transform_indices = @transform_4, window_bounds = array<i64: 8, 1024>}, {transform_indices = @transform_5, window_bounds = array<i64: 8, 1024>}]} {
    %c0 = arith.constant 0 : index
    %0 = memref.load %arg1[%c0] : memref<8xf32, #tpu.memory_space<smem>>
    %c1 = arith.constant 1 : index
    %1 = memref.load %arg1[%c1] : memref<8xf32, #tpu.memory_space<smem>>
    %c2 = arith.constant 2 : index
    %2 = memref.load %arg1[%c2] : memref<8xf32, #tpu.memory_space<smem>>
    %c3 = arith.constant 3 : index
    %3 = memref.load %arg1[%c3] : memref<8xf32, #tpu.memory_space<smem>>
    %c4 = arith.constant 4 : index
    %4 = memref.load %arg1[%c4] : memref<8xf32, #tpu.memory_space<smem>>
    %c5 = arith.constant 5 : index
    %5 = memref.load %arg1[%c5] : memref<8xf32, #tpu.memory_space<smem>>
    %c6 = arith.constant 6 : index
    %6 = memref.load %arg1[%c6] : memref<8xf32, #tpu.memory_space<smem>>
    %c7 = arith.constant 7 : index
    %7 = memref.load %arg1[%c7] : memref<8xf32, #tpu.memory_space<smem>>
    %c0_0 = arith.constant 0 : index
    %8 = memref.load %arg2[%c0_0] : memref<8xf32, #tpu.memory_space<smem>>
    %c1_1 = arith.constant 1 : index
    %9 = memref.load %arg2[%c1_1] : memref<8xf32, #tpu.memory_space<smem>>
    %c2_2 = arith.constant 2 : index
    %10 = memref.load %arg2[%c2_2] : memref<8xf32, #tpu.memory_space<smem>>
    %c3_3 = arith.constant 3 : index
    %11 = memref.load %arg2[%c3_3] : memref<8xf32, #tpu.memory_space<smem>>
    %c4_4 = arith.constant 4 : index
    %12 = memref.load %arg2[%c4_4] : memref<8xf32, #tpu.memory_space<smem>>
    %c5_5 = arith.constant 5 : index
    %13 = memref.load %arg2[%c5_5] : memref<8xf32, #tpu.memory_space<smem>>
    %c6_6 = arith.constant 6 : index
    %14 = memref.load %arg2[%c6_6] : memref<8xf32, #tpu.memory_space<smem>>
    %c7_7 = arith.constant 7 : index
    %15 = memref.load %arg2[%c7_7] : memref<8xf32, #tpu.memory_space<smem>>
    %c0_8 = arith.constant 0 : index
    %16 = memref.load %arg3[%c0_8] : memref<8xf32, #tpu.memory_space<smem>>
    %c1_9 = arith.constant 1 : index
    %17 = memref.load %arg3[%c1_9] : memref<8xf32, #tpu.memory_space<smem>>
    %c2_10 = arith.constant 2 : index
    %18 = memref.load %arg3[%c2_10] : memref<8xf32, #tpu.memory_space<smem>>
    %c3_11 = arith.constant 3 : index
    %19 = memref.load %arg3[%c3_11] : memref<8xf32, #tpu.memory_space<smem>>
    %c4_12 = arith.constant 4 : index
    %20 = memref.load %arg3[%c4_12] : memref<8xf32, #tpu.memory_space<smem>>
    %c5_13 = arith.constant 5 : index
    %21 = memref.load %arg3[%c5_13] : memref<8xf32, #tpu.memory_space<smem>>
    %c6_14 = arith.constant 6 : index
    %22 = memref.load %arg3[%c6_14] : memref<8xf32, #tpu.memory_space<smem>>
    %c7_15 = arith.constant 7 : index
    %23 = memref.load %arg3[%c7_15] : memref<8xf32, #tpu.memory_space<smem>>
    %c0_16 = arith.constant 0 : index
    %24 = memref.load %arg4[%c0_16] : memref<1xf32, #tpu.memory_space<smem>>
    %25 = vector.broadcast %24 : f32 to vector<8x1024xf32>
    %c0_i32 = arith.constant 0 : i32
    %c8_i32 = arith.constant 8 : i32
    %26 = arith.muli %c0_i32, %c8_i32 : i32
    %27 = tpu.assume_multiple %26, 8 : i32
    %28 = arith.index_cast %27 : i32 to index
    %c0_17 = arith.constant 0 : index
    %29 = vector.load %arg5[%28, %c0_17] : memref<8x1024xf32, #tpu.memory_space<vmem>>, vector<8x1024xf32>
    %30 = vector.broadcast %0 : f32 to vector<8x1024xf32>
    %31 = arith.mulf %29, %30 : vector<8x1024xf32>
    %32 = vector.broadcast %8 : f32 to vector<8x1024xf32>
    %33 = arith.addf %31, %32 : vector<8x1024xf32>
    %cst = arith.constant 0.000000e+00 : f32
    %34 = vector.broadcast %cst : f32 to vector<8x1024xf32>
    %35 = arith.maximumf %33, %34 : vector<8x1024xf32>
    %36 = vector.broadcast %16 : f32 to vector<8x1024xf32>
    %37 = arith.mulf %35, %36 : vector<8x1024xf32>
    %38 = arith.addf %25, %37 : vector<8x1024xf32>
    %39 = vector.broadcast %1 : f32 to vector<8x1024xf32>
    %40 = arith.mulf %29, %39 : vector<8x1024xf32>
    %41 = vector.broadcast %9 : f32 to vector<8x1024xf32>
    %42 = arith.addf %40, %41 : vector<8x1024xf32>
    %cst_18 = arith.constant 0.000000e+00 : f32
    %43 = vector.broadcast %cst_18 : f32 to vector<8x1024xf32>
    %44 = arith.maximumf %42, %43 : vector<8x1024xf32>
    %45 = vector.broadcast %17 : f32 to vector<8x1024xf32>
    %46 = arith.mulf %44, %45 : vector<8x1024xf32>
    %47 = arith.addf %38, %46 : vector<8x1024xf32>
    %48 = vector.broadcast %2 : f32 to vector<8x1024xf32>
    %49 = arith.mulf %29, %48 : vector<8x1024xf32>
    %50 = vector.broadcast %10 : f32 to vector<8x1024xf32>
    %51 = arith.addf %49, %50 : vector<8x1024xf32>
    %cst_19 = arith.constant 0.000000e+00 : f32
    %52 = vector.broadcast %cst_19 : f32 to vector<8x1024xf32>
    %53 = arith.maximumf %51, %52 : vector<8x1024xf32>
    %54 = vector.broadcast %18 : f32 to vector<8x1024xf32>
    %55 = arith.mulf %53, %54 : vector<8x1024xf32>
    %56 = arith.addf %47, %55 : vector<8x1024xf32>
    %57 = vector.broadcast %3 : f32 to vector<8x1024xf32>
    %58 = arith.mulf %29, %57 : vector<8x1024xf32>
    %59 = vector.broadcast %11 : f32 to vector<8x1024xf32>
    %60 = arith.addf %58, %59 : vector<8x1024xf32>
    %cst_20 = arith.constant 0.000000e+00 : f32
    %61 = vector.broadcast %cst_20 : f32 to vector<8x1024xf32>
    %62 = arith.maximumf %60, %61 : vector<8x1024xf32>
    %63 = vector.broadcast %19 : f32 to vector<8x1024xf32>
    %64 = arith.mulf %62, %63 : vector<8x1024xf32>
    %65 = arith.addf %56, %64 : vector<8x1024xf32>
    %66 = vector.broadcast %4 : f32 to vector<8x1024xf32>
    %67 = arith.mulf %29, %66 : vector<8x1024xf32>
    %68 = vector.broadcast %12 : f32 to vector<8x1024xf32>
    %69 = arith.addf %67, %68 : vector<8x1024xf32>
    %cst_21 = arith.constant 0.000000e+00 : f32
    %70 = vector.broadcast %cst_21 : f32 to vector<8x1024xf32>
    %71 = arith.maximumf %69, %70 : vector<8x1024xf32>
    %72 = vector.broadcast %20 : f32 to vector<8x1024xf32>
    %73 = arith.mulf %71, %72 : vector<8x1024xf32>
    %74 = arith.addf %65, %73 : vector<8x1024xf32>
    %75 = vector.broadcast %5 : f32 to vector<8x1024xf32>
    %76 = arith.mulf %29, %75 : vector<8x1024xf32>
    %77 = vector.broadcast %13 : f32 to vector<8x1024xf32>
    %78 = arith.addf %76, %77 : vector<8x1024xf32>
    %cst_22 = arith.constant 0.000000e+00 : f32
    %79 = vector.broadcast %cst_22 : f32 to vector<8x1024xf32>
    %80 = arith.maximumf %78, %79 : vector<8x1024xf32>
    %81 = vector.broadcast %21 : f32 to vector<8x1024xf32>
    %82 = arith.mulf %80, %81 : vector<8x1024xf32>
    %83 = arith.addf %74, %82 : vector<8x1024xf32>
    %84 = vector.broadcast %6 : f32 to vector<8x1024xf32>
    %85 = arith.mulf %29, %84 : vector<8x1024xf32>
    %86 = vector.broadcast %14 : f32 to vector<8x1024xf32>
    %87 = arith.addf %85, %86 : vector<8x1024xf32>
    %cst_23 = arith.constant 0.000000e+00 : f32
    %88 = vector.broadcast %cst_23 : f32 to vector<8x1024xf32>
    %89 = arith.maximumf %87, %88 : vector<8x1024xf32>
    %90 = vector.broadcast %22 : f32 to vector<8x1024xf32>
    %91 = arith.mulf %89, %90 : vector<8x1024xf32>
    %92 = arith.addf %83, %91 : vector<8x1024xf32>
    %93 = vector.broadcast %7 : f32 to vector<8x1024xf32>
    %94 = arith.mulf %29, %93 : vector<8x1024xf32>
    %95 = vector.broadcast %15 : f32 to vector<8x1024xf32>
    %96 = arith.addf %94, %95 : vector<8x1024xf32>
    %cst_24 = arith.constant 0.000000e+00 : f32
    %97 = vector.broadcast %cst_24 : f32 to vector<8x1024xf32>
    %98 = arith.maximumf %96, %97 : vector<8x1024xf32>
    %99 = vector.broadcast %23 : f32 to vector<8x1024xf32>
    %100 = arith.mulf %98, %99 : vector<8x1024xf32>
    %101 = arith.addf %92, %100 : vector<8x1024xf32>
    %102 = arith.index_cast %27 : i32 to index
    %c0_25 = arith.constant 0 : index
    %103 = vector.load %arg6[%102, %c0_25] : memref<8x1024xf32, #tpu.memory_space<vmem>>, vector<8x1024xf32>
    tpu.vector_store %arg6[%102, %c0_25], %101 {strides = array<i32>} : memref<8x1024xf32, #tpu.memory_space<vmem>>, vector<8x1024xf32>,
    %c1_i32 = arith.constant 1 : i32
    return
  }
  func.func @transform_0(%arg0: i32) -> i32 {
    %c0_i32 = arith.constant 0 : i32
    %c0_i32_0 = arith.constant 0 : i32
    return %c0_i32 : i32
  }
  func.func @transform_1(%arg0: i32) -> i32 {
    %c0_i32 = arith.constant 0 : i32
    %c0_i32_0 = arith.constant 0 : i32
    return %c0_i32 : i32
  }
  func.func @transform_2(%arg0: i32) -> i32 {
    %c0_i32 = arith.constant 0 : i32
    %c0_i32_0 = arith.constant 0 : i32
    return %c0_i32 : i32
  }
  func.func @transform_3(%arg0: i32) -> i32 {
    %c0_i32 = arith.constant 0 : i32
    %c0_i32_0 = arith.constant 0 : i32
    return %c0_i32 : i32
  }
  func.func @transform_4(%arg0: i32) -> (i32, i32) {
    %c0_i32 = arith.constant 0 : i32
    %c0_i32_0 = arith.constant 0 : i32
    return %arg0, %c0_i32 : i32, i32
  }
  func.func @transform_5(%arg0: i32) -> (i32, i32) {
    %c0_i32 = arith.constant 0 : i32
    %c0_i32_0 = arith.constant 0 : i32
    return %arg0, %c0_i32 : i32, i32
  }
}

</mosaic_0001>

<llo_original>
// kernel: tpu_custom_call.1
$region0: #{tpu_custom_call.1}
  #allocation0 [shape = 'u32[]', space=smem, size = 0x4, offset = 0x4, fixed_abs, tag = 'smem constant byte address 0x4 - core index']
  #allocation1 [shape = 'u32[144,128]{1,0:T(1,128)}', space=vmem, size = 0x12000, scoped, tag = 'internal scratch']
  #allocation2 [shape = 'f32[1]{0:T(128)S(6)}', space=smem, size = 0x200, scoped, tag = 'scoped memory for tpu_custom_call.1']
  %s0 = inlined_call_operand.vmem [shape: f32[8], index: 0, kind: input, shape index: {}]
  %s1 = inlined_call_operand.vmem [shape: f32[8], index: 1, kind: input, shape index: {}]
  %s2 = inlined_call_operand.vmem [shape: f32[8], index: 2, kind: input, shape index: {}]
  %s3 = inlined_call_operand.<no memory space> [shape: f32[1], index: 3, kind: input, shape index: {}]
  %s4 = inlined_call_operand.hbm [shape: f32[8,1024], index: 4, kind: input, shape index: {}]
  %s5 = inlined_call_operand.hbm [shape: f32[8,1024], index: 5, kind: output, shape index: {}]
  %s6 = sld [smem:[#allocation0]]
  $region46: #{tpu_custom_call.1} parent=0
    _
  %s8 = ssub.s32 1, %s6
  %s9 = scalar_select 0, %s8, %s6
  %10 = sst [smem:[#allocation2]] %s3
  $region1: #{tpu_custom_call.1} parent=0
    #allocation3 [shape = 'u8[512]{0}', space=smem, size = 0x200, scoped, tag = 'input window, operand 0, single buffered']
    #allocation4 [shape = 's32[1]{0}', space=sflag, size = 0x4, scoped, tag = 'scoped memory for tpu_custom_call.1']
    #allocation5 [shape = 's32[1]{0}', space=sflag, size = 0x4, scoped, tag = 'scoped memory for tpu_custom_call.1']
    #allocation6 [shape = 's32[1]{0}', space=sflag, size = 0x4, scoped, tag = 'scoped memory for tpu_custom_call.1']
    #allocation7 [shape = 'u8[512]{0}', space=smem, size = 0x200, scoped, tag = 'input window, operand 1, single buffered']
    #allocation8 [shape = 's32[1]{0}', space=sflag, size = 0x4, scoped, tag = 'scoped memory for tpu_custom_call.1']
    #allocation9 [shape = 'u8[512]{0}', space=smem, size = 0x200, scoped, tag = 'input window, operand 2, single buffered']
    #allocation10 [shape = 'u8[32768]{0}', space=vmem, size = 0x8000, scoped, tag = 'input window, operand 4, single buffered']
    #allocation11 [shape = 'u8[32768]{0}', space=vmem, size = 0x8000, scoped, tag = 'output window, operand 0, single buffered']
    %11 = vsyncpa [#allocation6], 0
    %12 = vsyncpa [#allocation8], 0
    %13 = vsyncpa [#allocation4], 0
    %14 = vsyncpa [#allocation5], 0
    // Predicated region
    $region2: #{tpu_custom_call.1} parent=1 // pred_check
      _
    $region3: #{tpu_custom_call.1} parent=1 // pred_check_branch
      %16 = sbr.rel (0) target = $region5
    $region4: #{tpu_custom_call.1} parent=1 // pred_region
      %s18 = ssub.s32 16, 16
      %19 = vsyncadd [#allocation6], %s18
      %s21 = sshll.u32 %s0, 4
      %s22 = int_to_ptr.vmem [resolvable:$true] %s21
      %24 = dma.vmem_to_smem %s22, 16, [#allocation3], [#allocation6]
    $region5: #{tpu_custom_call.1} parent=1 // pred_fallthru
      _
    // Predicated region
    $region6: #{tpu_custom_call.1} parent=1 // pred_check
      _
    $region7: #{tpu_custom_call.1} parent=1 // pred_check_branch
      %26 = sbr.rel (0) target = $region9
    $region8: #{tpu_custom_call.1} parent=1 // pred_region
      %s28 = ssub.s32 16, 16
      %29 = vsyncadd [#allocation8], %s28
      %s31 = sshll.u32 %s1, 4
      %s32 = int_to_ptr.vmem [resolvable:$true] %s31
      %34 = dma.vmem_to_smem %s32, 16, [#allocation7], [#allocation8]
    $region9: #{tpu_custom_call.1} parent=1 // pred_fallthru
      _
    // Predicated region
    $region10: #{tpu_custom_call.1} parent=1 // pred_check
      _
    $region11: #{tpu_custom_call.1} parent=1 // pred_check_branch
      %36 = sbr.rel (0) target = $region13
    $region12: #{tpu_custom_call.1} parent=1 // pred_region
      %s38 = ssub.s32 16, 16
      %39 = vsyncadd [#allocation8], %s38
      %s41 = sshll.u32 %s2, 4
      %s42 = int_to_ptr.vmem [resolvable:$true] %s41
      %44 = dma.vmem_to_smem %s42, 16, [#allocation9], [#allocation8]
    $region13: #{tpu_custom_call.1} parent=1 // pred_fallthru
      _
    // Predicated region
    $region14: #{tpu_custom_call.1} parent=1 // pred_check
      _
    $region15: #{tpu_custom_call.1} parent=1 // pred_check_branch
      %46 = sbr.rel (0) target = $region17
    $region16: #{tpu_custom_call.1} parent=1 // pred_region
      _
    $region17: #{tpu_custom_call.1} parent=1 // pred_fallthru
      _
    // Predicated region
    $region18: #{tpu_custom_call.1} parent=1 // pred_check
      _
    $region19: #{tpu_custom_call.1} parent=1 // pred_check_branch
      %48 = sbr.rel (0) target = $region21
    $region20: #{tpu_custom_call.1} parent=1 // pred_region
      %s50 = ssub.s32 1024, 1024
      %51 = vsyncadd [#allocation4], %s50
      %s53 = sshll.u32 [#allocation10], 4
      %s54 = int_to_ptr.vmem [resolvable:$true] %s53
      %56 = dma.hbm_to_vmem [thread:$0]  %s4, 1024, %s54, [#allocation4]
    $region21: #{tpu_custom_call.1} parent=1 // pred_fallthru
      _
    // Predicated region
    $region22: #{tpu_custom_call.1} parent=1 // pred_check
      _
    $region23: #{tpu_custom_call.1} parent=1 // pred_check_branch
      %58 = sbr.rel (0) target = $region25
    $region24: #{tpu_custom_call.1} parent=1 // pred_region
      %59 = dma.done [#allocation6], 16
    $region25: #{tpu_custom_call.1} parent=1 // pred_fallthru
      _
    // Predicated region
    $region26: #{tpu_custom_call.1} parent=1 // pred_check
      _
    $region27: #{tpu_custom_call.1} parent=1 // pred_check_branch
      %61 = sbr.rel (0) target = $region29
    $region28: #{tpu_custom_call.1} parent=1 // pred_region
      %62 = dma.done [#allocation8], 16
    $region29: #{tpu_custom_call.1} parent=1 // pred_fallthru
      _
    // Predicated region
    $region30: #{tpu_custom_call.1} parent=1 // pred_check
      _
    $region31: #{tpu_custom_call.1} parent=1 // pred_check_branch
      %64 = sbr.rel (0) target = $region33
    $region32: #{tpu_custom_call.1} parent=1 // pred_region
      %65 = dma.done [#allocation8], 16
    $region33: #{tpu_custom_call.1} parent=1 // pred_fallthru
      _
    // Predicated region
    $region34: #{tpu_custom_call.1} parent=1 // pred_check
      _
    $region35: #{tpu_custom_call.1} parent=1 // pred_check_branch
      %67 = sbr.rel (0) target = $region37
    $region36: #{tpu_custom_call.1} parent=1 // pred_region
      %68 = dma.done [#allocation4], 1024
    $region37: #{tpu_custom_call.1} parent=1 // pred_fallthru
      _
    %69 = sfence
    %s70 = sld [smem:[#allocation3]]
    %s71 = sld [smem:[#allocation3 + $0x1]]
    %s72 = sld [smem:[#allocation3 + $0x2]]
    %s73 = sld [smem:[#allocation3 + $0x3]]
    %s74 = sld [smem:[#allocation3 + $0x4]]
    %s75 = sld [smem:[#allocation3 + $0x5]]
    %s76 = sld [smem:[#allocation3 + $0x6]]
    %s77 = sld [smem:[#allocation3 + $0x7]]
    %s78 = sld [smem:[#allocation7]]
    %s79 = sld [smem:[#allocation7 + $0x1]]
    %s80 = sld [smem:[#allocation7 + $0x2]]
    %s81 = sld [smem:[#allocation7 + $0x3]]
    %s82 = sld [smem:[#allocation7 + $0x4]]
    %s83 = sld [smem:[#allocation7 + $0x5]]
    %s84 = sld [smem:[#allocation7 + $0x6]]
    %s85 = sld [smem:[#allocation7 + $0x7]]
    %s86 = sld [smem:[#allocation9]]
    %s87 = sld [smem:[#allocation9 + $0x1]]
    %s88 = sld [smem:[#allocation9 + $0x2]]
    %s89 = sld [smem:[#allocation9 + $0x3]]
    %s90 = sld [smem:[#allocation9 + $0x4]]
    %s91 = sld [smem:[#allocation9 + $0x5]]
    %s92 = sld [smem:[#allocation9 + $0x6]]
    %s93 = sld [smem:[#allocation9 + $0x7]]
    %s94 = sld [smem:[#allocation2]]
    %v95 = vstv %s94
    %s96 = smul.u32 0, 8
    %s97 = smul.addr %s96, 8
    %s98 = scalar_lea.vmem [#allocation10], %s97
    %v99 = vld [vmem:[%s98] sm:$0xff]
    %v100 = vld [vmem:[%s98 + $0x8] sm:$0xff]
    %v101 = vld [vmem:[%s98 + $0x10] sm:$0xff]
    %v102 = vld [vmem:[%s98 + $0x18] sm:$0xff]
    %v103 = vld [vmem:[%s98 + $0x20] sm:$0xff]
    %v104 = vld [vmem:[%s98 + $0x28] sm:$0xff]
    %v105 = vld [vmem:[%s98 + $0x30] sm:$0xff]
    %v106 = vld [vmem:[%s98 + $0x38] sm:$0xff]
    %v107 = vstv %s70
    %v108 = vmul.f32 %v99, %v107
    %v109 = vmul.f32 %v100, %v107
    %v110 = vmul.f32 %v101, %v107
    %v111 = vmul.f32 %v102, %v107
    %v112 = vmul.f32 %v103, %v107
    %v113 = vmul.f32 %v104, %v107
    %v114 = vmul.f32 %v105, %v107
    %v115 = vmul.f32 %v106, %v107
    %v116 = vstv %s78
    %v117 = vadd.f32 %v108, %v116
    %v118 = vadd.f32 %v109, %v116
    %v119 = vadd.f32 %v110, %v116
    %v120 = vadd.f32 %v111, %v116
    %v121 = vadd.f32 %v112, %v116
    %v122 = vadd.f32 %v113, %v116
    %v123 = vadd.f32 %v114, %v116
    %v124 = vadd.f32 %v115, %v116
    %v125 = vmax.f32 %v117, 0.0
    %v126 = vmax.f32 %v118, 0.0
    %v127 = vmax.f32 %v119, 0.0
    %v128 = vmax.f32 %v120, 0.0
    %v129 = vmax.f32 %v121, 0.0
    %v130 = vmax.f32 %v122, 0.0
    %v131 = vmax.f32 %v123, 0.0
    %v132 = vmax.f32 %v124, 0.0
    %v133 = vstv %s86
    %v134 = vmul.f32 %v125, %v133
    %v135 = vmul.f32 %v126, %v133
    %v136 = vmul.f32 %v127, %v133
    %v137 = vmul.f32 %v128, %v133
    %v138 = vmul.f32 %v129, %v133
    %v139 = vmul.f32 %v130, %v133
    %v140 = vmul.f32 %v131, %v133
    %v141 = vmul.f32 %v132, %v133
    %v142 = vadd.f32 %v95, %v134
    %v143 = vadd.f32 %v95, %v135
    %v144 = vadd.f32 %v95, %v136
    %v145 = vadd.f32 %v95, %v137
    %v146 = vadd.f32 %v95, %v138
    %v147 = vadd.f32 %v95, %v139
    %v148 = vadd.f32 %v95, %v140
    %v149 = vadd.f32 %v95, %v141
    %v150 = vstv %s71
    %v151 = vmul.f32 %v99, %v150
    %v152 = vmul.f32 %v100, %v150
    %v153 = vmul.f32 %v101, %v150
    %v154 = vmul.f32 %v102, %v150
    %v155 = vmul.f32 %v103, %v150
    %v156 = vmul.f32 %v104, %v150
    %v157 = vmul.f32 %v105, %v150
    %v158 = vmul.f32 %v106, %v150
    %v159 = vstv %s79
    %v160 = vadd.f32 %v151, %v159
    %v161 = vadd.f32 %v152, %v159
    %v162 = vadd.f32 %v153, %v159
    %v163 = vadd.f32 %v154, %v159
    %v164 = vadd.f32 %v155, %v159
    %v165 = vadd.f32 %v156, %v159
    %v166 = vadd.f32 %v157, %v159
    %v167 = vadd.f32 %v158, %v159
    %v168 = vmax.f32 %v160, 0.0
    %v169 = vmax.f32 %v161, 0.0
    %v170 = vmax.f32 %v162, 0.0
    %v171 = vmax.f32 %v163, 0.0
    %v172 = vmax.f32 %v164, 0.0
    %v173 = vmax.f32 %v165, 0.0
    %v174 = vmax.f32 %v166, 0.0
    %v175 = vmax.f32 %v167, 0.0
    %v176 = vstv %s87
    %v177 = vmul.f32 %v168, %v176
    %v178 = vmul.f32 %v169, %v176
    %v179 = vmul.f32 %v170, %v176
    %v180 = vmul.f32 %v171, %v176
    %v181 = vmul.f32 %v172, %v176
    %v182 = vmul.f32 %v173, %v176
    %v183 = vmul.f32 %v174, %v176
    %v184 = vmul.f32 %v175, %v176
    %v185 = vadd.f32 %v142, %v177
    %v186 = vadd.f32 %v143, %v178
    %v187 = vadd.f32 %v144, %v179
    %v188 = vadd.f32 %v145, %v180
    %v189 = vadd.f32 %v146, %v181
    %v190 = vadd.f32 %v147, %v182
    %v191 = vadd.f32 %v148, %v183
    %v192 = vadd.f32 %v149, %v184
    %v193 = vstv %s72
    %v194 = vmul.f32 %v99, %v193
    %v195 = vmul.f32 %v100, %v193
    %v196 = vmul.f32 %v101, %v193
    %v197 = vmul.f32 %v102, %v193
    %v198 = vmul.f32 %v103, %v193
    %v199 = vmul.f32 %v104, %v193
    %v200 = vmul.f32 %v105, %v193
    %v201 = vmul.f32 %v106, %v193
    %v202 = vstv %s80
    %v203 = vadd.f32 %v194, %v202
    %v204 = vadd.f32 %v195, %v202
    %v205 = vadd.f32 %v196, %v202
    %v206 = vadd.f32 %v197, %v202
    %v207 = vadd.f32 %v198, %v202
    %v208 = vadd.f32 %v199, %v202
    %v209 = vadd.f32 %v200, %v202
    %v210 = vadd.f32 %v201, %v202
    %v211 = vmax.f32 %v203, 0.0
    %v212 = vmax.f32 %v204, 0.0
    %v213 = vmax.f32 %v205, 0.0
    %v214 = vmax.f32 %v206, 0.0
    %v215 = vmax.f32 %v207, 0.0
    %v216 = vmax.f32 %v208, 0.0
    %v217 = vmax.f32 %v209, 0.0
    %v218 = vmax.f32 %v210, 0.0
    %v219 = vstv %s88
    %v220 = vmul.f32 %v211, %v219
    %v221 = vmul.f32 %v212, %v219
    %v222 = vmul.f32 %v213, %v219
    %v223 = vmul.f32 %v214, %v219
    %v224 = vmul.f32 %v215, %v219
    %v225 = vmul.f32 %v216, %v219
    %v226 = vmul.f32 %v217, %v219
    %v227 = vmul.f32 %v218, %v219
    %v228 = vadd.f32 %v185, %v220
    %v229 = vadd.f32 %v186, %v221
    %v230 = vadd.f32 %v187, %v222
    %v231 = vadd.f32 %v188, %v223
    %v232 = vadd.f32 %v189, %v224
    %v233 = vadd.f32 %v190, %v225
    %v234 = vadd.f32 %v191, %v226
    %v235 = vadd.f32 %v192, %v227
    %v236 = vstv %s73
    %v237 = vmul.f32 %v99, %v236
    %v238 = vmul.f32 %v100, %v236
    %v239 = vmul.f32 %v101, %v236
    %v240 = vmul.f32 %v102, %v236
    %v241 = vmul.f32 %v103, %v236
    %v242 = vmul.f32 %v104, %v236
    %v243 = vmul.f32 %v105, %v236
    %v244 = vmul.f32 %v106, %v236
    %v245 = vstv %s81
    %v246 = vadd.f32 %v237, %v245
    %v247 = vadd.f32 %v238, %v245
    %v248 = vadd.f32 %v239, %v245
    %v249 = vadd.f32 %v240, %v245
    %v250 = vadd.f32 %v241, %v245
    %v251 = vadd.f32 %v242, %v245
    %v252 = vadd.f32 %v243, %v245
    %v253 = vadd.f32 %v244, %v245
    %v254 = vmax.f32 %v246, 0.0
    %v255 = vmax.f32 %v247, 0.0
    %v256 = vmax.f32 %v248, 0.0
    %v257 = vmax.f32 %v249, 0.0
    %v258 = vmax.f32 %v250, 0.0
    %v259 = vmax.f32 %v251, 0.0
    %v260 = vmax.f32 %v252, 0.0
    %v261 = vmax.f32 %v253, 0.0
    %v262 = vstv %s89
    %v263 = vmul.f32 %v254, %v262
    %v264 = vmul.f32 %v255, %v262
    %v265 = vmul.f32 %v256, %v262
    %v266 = vmul.f32 %v257, %v262
    %v267 = vmul.f32 %v258, %v262
    %v268 = vmul.f32 %v259, %v262
    %v269 = vmul.f32 %v260, %v262
    %v270 = vmul.f32 %v261, %v262
    %v271 = vadd.f32 %v228, %v263
    %v272 = vadd.f32 %v229, %v264
    %v273 = vadd.f32 %v230, %v265
    %v274 = vadd.f32 %v231, %v266
    %v275 = vadd.f32 %v232, %v267
    %v276 = vadd.f32 %v233, %v268
    %v277 = vadd.f32 %v234, %v269
    %v278 = vadd.f32 %v235, %v270
    %v279 = vstv %s74
    %v280 = vmul.f32 %v99, %v279
    %v281 = vmul.f32 %v100, %v279
    %v282 = vmul.f32 %v101, %v279
    %v283 = vmul.f32 %v102, %v279
    %v284 = vmul.f32 %v103, %v279
    %v285 = vmul.f32 %v104, %v279
    %v286 = vmul.f32 %v105, %v279
    %v287 = vmul.f32 %v106, %v279
    %v288 = vstv %s82
    %v289 = vadd.f32 %v280, %v288
    %v290 = vadd.f32 %v281, %v288
    %v291 = vadd.f32 %v282, %v288
    %v292 = vadd.f32 %v283, %v288
    %v293 = vadd.f32 %v284, %v288
    %v294 = vadd.f32 %v285, %v288
    %v295 = vadd.f32 %v286, %v288
    %v296 = vadd.f32 %v287, %v288
    %v297 = vmax.f32 %v289, 0.0
    %v298 = vmax.f32 %v290, 0.0
    %v299 = vmax.f32 %v291, 0.0
    %v300 = vmax.f32 %v292, 0.0
    %v301 = vmax.f32 %v293, 0.0
    %v302 = vmax.f32 %v294, 0.0
    %v303 = vmax.f32 %v295, 0.0
    %v304 = vmax.f32 %v296, 0.0
    %v305 = vstv %s90
    %v306 = vmul.f32 %v297, %v305
    %v307 = vmul.f32 %v298, %v305
    %v308 = vmul.f32 %v299, %v305
    %v309 = vmul.f32 %v300, %v305
    %v310 = vmul.f32 %v301, %v305
    %v311 = vmul.f32 %v302, %v305
    %v312 = vmul.f32 %v303, %v305
    %v313 = vmul.f32 %v304, %v305
    %v314 = vadd.f32 %v271, %v306
    %v315 = vadd.f32 %v272, %v307
    %v316 = vadd.f32 %v273, %v308
    %v317 = vadd.f32 %v274, %v309
    %v318 = vadd.f32 %v275, %v310
    %v319 = vadd.f32 %v276, %v311
    %v320 = vadd.f32 %v277, %v312
    %v321 = vadd.f32 %v278, %v313
    %v322 = vstv %s75
    %v323 = vmul.f32 %v99, %v322
    %v324 = vmul.f32 %v100, %v322
    %v325 = vmul.f32 %v101, %v322
    %v326 = vmul.f32 %v102, %v322
    %v327 = vmul.f32 %v103, %v322
    %v328 = vmul.f32 %v104, %v322
    %v329 = vmul.f32 %v105, %v322
    %v330 = vmul.f32 %v106, %v322
    %v331 = vstv %s83
    %v332 = vadd.f32 %v323, %v331
    %v333 = vadd.f32 %v324, %v331
    %v334 = vadd.f32 %v325, %v331
    %v335 = vadd.f32 %v326, %v331
    %v336 = vadd.f32 %v327, %v331
    %v337 = vadd.f32 %v328, %v331
    %v338 = vadd.f32 %v329, %v331
    %v339 = vadd.f32 %v330, %v331
    %v340 = vmax.f32 %v332, 0.0
    %v341 = vmax.f32 %v333, 0.0
    %v342 = vmax.f32 %v334, 0.0
    %v343 = vmax.f32 %v335, 0.0
    %v344 = vmax.f32 %v336, 0.0
    %v345 = vmax.f32 %v337, 0.0
    %v346 = vmax.f32 %v338, 0.0
    %v347 = vmax.f32 %v339, 0.0
    %v348 = vstv %s91
    %v349 = vmul.f32 %v340, %v348
    %v350 = vmul.f32 %v341, %v348
    %v351 = vmul.f32 %v342, %v348
    %v352 = vmul.f32 %v343, %v348
    %v353 = vmul.f32 %v344, %v348
    %v354 = vmul.f32 %v345, %v348
    %v355 = vmul.f32 %v346, %v348
    %v356 = vmul.f32 %v347, %v348
    %v357 = vadd.f32 %v314, %v349
    %v358 = vadd.f32 %v315, %v350
    %v359 = vadd.f32 %v316, %v351
    %v360 = vadd.f32 %v317, %v352
    %v361 = vadd.f32 %v318, %v353
    %v362 = vadd.f32 %v319, %v354
    %v363 = vadd.f32 %v320, %v355
    %v364 = vadd.f32 %v321, %v356
    %v365 = vstv %s76
    %v366 = vmul.f32 %v99, %v365
    %v367 = vmul.f32 %v100, %v365
    %v368 = vmul.f32 %v101, %v365
    %v369 = vmul.f32 %v102, %v365
    %v370 = vmul.f32 %v103, %v365
    %v371 = vmul.f32 %v104, %v365
    %v372 = vmul.f32 %v105, %v365
    %v373 = vmul.f32 %v106, %v365
    %v374 = vstv %s84
    %v375 = vadd.f32 %v366, %v374
    %v376 = vadd.f32 %v367, %v374
    %v377 = vadd.f32 %v368, %v374
    %v378 = vadd.f32 %v369, %v374
    %v379 = vadd.f32 %v370, %v374
    %v380 = vadd.f32 %v371, %v374
    %v381 = vadd.f32 %v372, %v374
    %v382 = vadd.f32 %v373, %v374
    %v383 = vmax.f32 %v375, 0.0
    %v384 = vmax.f32 %v376, 0.0
    %v385 = vmax.f32 %v377, 0.0
    %v386 = vmax.f32 %v378, 0.0
    %v387 = vmax.f32 %v379, 0.0
    %v388 = vmax.f32 %v380, 0.0
    %v389 = vmax.f32 %v381, 0.0
    %v390 = vmax.f32 %v382, 0.0
    %v391 = vstv %s92
    %v392 = vmul.f32 %v383, %v391
    %v393 = vmul.f32 %v384, %v391
    %v394 = vmul.f32 %v385, %v391
    %v395 = vmul.f32 %v386, %v391
    %v396 = vmul.f32 %v387, %v391
    %v397 = vmul.f32 %v388, %v391
    %v398 = vmul.f32 %v389, %v391
    %v399 = vmul.f32 %v390, %v391
    %v400 = vadd.f32 %v357, %v392
    %v401 = vadd.f32 %v358, %v393
    %v402 = vadd.f32 %v359, %v394
    %v403 = vadd.f32 %v360, %v395
    %v404 = vadd.f32 %v361, %v396
    %v405 = vadd.f32 %v362, %v397
    %v406 = vadd.f32 %v363, %v398
    %v407 = vadd.f32 %v364, %v399
    %v408 = vstv %s77
    %v409 = vmul.f32 %v99, %v408
    %v410 = vmul.f32 %v100, %v408
    %v411 = vmul.f32 %v101, %v408
    %v412 = vmul.f32 %v102, %v408
    %v413 = vmul.f32 %v103, %v408
    %v414 = vmul.f32 %v104, %v408
    %v415 = vmul.f32 %v105, %v408
    %v416 = vmul.f32 %v106, %v408
    %v417 = vstv %s85
    %v418 = vadd.f32 %v409, %v417
    %v419 = vadd.f32 %v410, %v417
    %v420 = vadd.f32 %v411, %v417
    %v421 = vadd.f32 %v412, %v417
    %v422 = vadd.f32 %v413, %v417
    %v423 = vadd.f32 %v414, %v417
    %v424 = vadd.f32 %v415, %v417
    %v425 = vadd.f32 %v416, %v417
    %v426 = vmax.f32 %v418, 0.0
    %v427 = vmax.f32 %v419, 0.0
    %v428 = vmax.f32 %v420, 0.0
    %v429 = vmax.f32 %v421, 0.0
    %v430 = vmax.f32 %v422, 0.0
    %v431 = vmax.f32 %v423, 0.0
    %v432 = vmax.f32 %v424, 0.0
    %v433 = vmax.f32 %v425, 0.0
    %v434 = vstv %s93
    %v435 = vmul.f32 %v426, %v434
    %v436 = vmul.f32 %v427, %v434
    %v437 = vmul.f32 %v428, %v434
    %v438 = vmul.f32 %v429, %v434
    %v439 = vmul.f32 %v430, %v434
    %v440 = vmul.f32 %v431, %v434
    %v441 = vmul.f32 %v432, %v434
    %v442 = vmul.f32 %v433, %v434
    %v443 = vadd.f32 %v400, %v435
    %v444 = vadd.f32 %v401, %v436
    %v445 = vadd.f32 %v402, %v437
    %v446 = vadd.f32 %v403, %v438
    %v447 = vadd.f32 %v404, %v439
    %v448 = vadd.f32 %v405, %v440
    %v449 = vadd.f32 %v406, %v441
    %v450 = vadd.f32 %v407, %v442
    %s451 = smul.addr %s96, 8
    %s452 = scalar_lea.vmem [#allocation11], %s451
    %453 = vst [vmem:[%s452] sm:$0xff] %v443
    %454 = vst [vmem:[%s452 + $0x8] sm:$0xff] %v444
    %455 = vst [vmem:[%s452 + $0x10] sm:$0xff] %v445
    %456 = vst [vmem:[%s452 + $0x18] sm:$0xff] %v446
    %457 = vst [vmem:[%s452 + $0x20] sm:$0xff] %v447
    %458 = vst [vmem:[%s452 + $0x28] sm:$0xff] %v448
    %459 = vst [vmem:[%s452 + $0x30] sm:$0xff] %v449
    %460 = vst [vmem:[%s452 + $0x38] sm:$0xff] %v450
    // Predicated region
    $region38: #{tpu_custom_call.1} parent=1 // pred_check
      _
    $region39: #{tpu_custom_call.1} parent=1 // pred_check_branch
      %462 = sbr.rel (0) target = $region41
    $region40: #{tpu_custom_call.1} parent=1 // pred_region
      %s464 = ssub.s32 1024, 1024
      %465 = vsyncadd [#allocation5], %s464
      %s467 = sshll.u32 [#allocation11], 4
      %s468 = int_to_ptr.vmem [resolvable:$true] %s467
      %470 = dma.vmem_to_hbm [thread:$0]  %s468, 1024, %s5, [#allocation5]
    $region41: #{tpu_custom_call.1} parent=1 // pred_fallthru
      _
    // Predicated region
    $region42: #{tpu_custom_call.1} parent=1 // pred_check
      _
    $region43: #{tpu_custom_call.1} parent=1 // pred_check_branch
      %472 = sbr.rel (0) target = $region45
    $region44: #{tpu_custom_call.1} parent=1 // pred_region
      %473 = dma.done [#allocation5], 1024
    $region45: #{tpu_custom_call.1} parent=1 // pred_fallthru
      _
    %474 = vsyncpa [#allocation4], 1
    %475 = vsyncpa [#allocation5], 1
    %476 = vsyncpa [#allocation6], 1
    %477 = vsyncpa [#allocation8], 1

</llo_original>
